<compile_context>
chip_gen: v6e
topology: v6e:2x2x1
jax: 0.10.0
libtpu: 0.0.40
codegen_flags: <defaults>
</compile_context>

<pallas_src>
import jax
import jax.numpy as jnp
from jax.experimental import pallas as pl
from jax.experimental.pallas import tpu as pltpu

TN_MAX = 128 * 1024  # points per block: 3*TN*4B = 1.5 MiB input tile, 0.5 MiB output tile


def sphere_sdf_kernel(params_ref, pts_ref, out_ref):
    # params_ref: SMEM (4,) = [cx, cy, cz, radius]
    # pts_ref:    VMEM (3, TN)   SoA coordinates
    # out_ref:    VMEM (1, TN)   lane-dense SDF slab
    cx = params_ref[0]
    cy = params_ref[1]
    cz = params_ref[2]
    r = params_ref[3]
    dx = pts_ref[0:1, :] - cx                  # (1, TN) VPU ops, scalar operands
    dy = pts_ref[1:2, :] - cy
    dz = pts_ref[2:3, :] - cz
    sq = dx * dx + dy * dy + dz * dz           # in-lane reduction, no XLU
    out_ref[...] = jnp.sqrt(sq) - r            # unmasked lane-dense store


def sphere_sdf(points, center, radius):
    """points: any shape (..., 3) float32; center: (1,3) or (3,); radius: scalar."""
    pts = points.reshape(-1, 3).astype(jnp.float32)
    n = pts.shape[0]

    # SoA layout: (3, N). (This transpose is one HBM pass of layout plumbing; if the
    # producer can emit SoA directly it disappears entirely.)
    pts_t = pts.T                                          # (3, n)

    # Pad N up to a multiple of 128 (lane width); only if n exceeds TN_MAX do we pad
    # to a multiple of the block. Pad is on the last axis of the (3, n) transpose so
    # XLA fuses transpose+pad into a single copy (no second full materialization).
    n_pad = max(pl.cdiv(n, 128) * 128, 128)
    if n_pad <= TN_MAX:
        tn = n_pad
    else:
        tn = TN_MAX
        n_pad = pl.cdiv(n, tn) * tn
    if n_pad != n:
        pts_t = jnp.pad(pts_t, ((0, 0), (0, n_pad - n)))

    # Pack center + radius into one SMEM scalar array.
    params = jnp.concatenate(
        [jnp.ravel(center), jnp.ravel(radius)]).astype(jnp.float32)   # (4,)

    out = pl.pallas_call(
        sphere_sdf_kernel,
        out_shape=jax.ShapeDtypeStruct((1, n_pad), jnp.float32),
        grid_spec=pltpu.PrefetchScalarGridSpec(
            num_scalar_prefetch=0,
            grid=(n_pad // tn,),
            in_specs=[
                pl.BlockSpec(memory_space=pltpu.MemorySpace.SMEM),   # [cx,cy,cz,r]
                pl.BlockSpec((3, tn), lambda i: (0, i)),             # SoA points tile
            ],
            out_specs=pl.BlockSpec((1, tn), lambda i: (0, i)),       # lane-dense output
        ),
        compiler_params=pltpu.CompilerParams(
            dimension_semantics=("parallel",),   # shard grid across v7x's 2 TCs
        ),
    )(params, pts_t)

    # Back to the PyTorch (N, 1) shape; slicing drops the padded tail.
    return out[0, :n].reshape(n, 1)


if __name__ == "__main__":
    key = jax.random.PRNGKey(0)
    # "cfg": center = [0.1, -0.2, 0.3], radius = 1.0 (deterministic init, unsqueeze(0))
    center = jnp.array([[0.1, -0.2, 0.3]], dtype=jnp.float32)   # (1, 3)
    radius = jnp.array(1.0, dtype=jnp.float32)                  # scalar parameter

    # points: (2, 256, 3) -> view(-1, 3) = (512, 3)
    points = jax.random.normal(key, (2, 256, 3), dtype=jnp.float32)

    out = sphere_sdf(points, center, radius)
    out = jax.block_until_ready(out)

    # reference check in plain JAX
    ref = jnp.linalg.norm(points.reshape(-1, 3) - center, axis=-1, keepdims=True) - radius
    assert out.shape == (512, 1)
    assert jnp.allclose(out, ref, atol=1e-5, rtol=1e-5)
    print("KERNEL_OK")
</pallas_src>

<mosaic_0001>
module attributes {stable_mosaic.version = 11 : i64} {
  func.func @sphere_sdf_kernel(%arg0: i32, %arg1: memref<4xf32, #tpu.memory_space<smem>>, %arg2: memref<3x512xf32, #tpu.memory_space<vmem>>, %arg3: memref<1x512xf32, #tpu.memory_space<vmem>>) attributes {dimension_semantics = [#tpu.dimension_semantics<parallel>], iteration_bounds = array<i64: 1>, scalar_prefetch = 0 : i64, scratch_operands = 0 : i64, tpu.core_type = #tpu.core_type<tc>, window_params = [{transform_indices = @transform_0, window_bounds = array<i64: 4>}, {transform_indices = @transform_1, window_bounds = array<i64: 3, 512>}, {transform_indices = @transform_2, window_bounds = array<i64: 1, 512>}]} {
    %c0 = arith.constant 0 : index
    %0 = memref.load %arg1[%c0] : memref<4xf32, #tpu.memory_space<smem>>
    %c1 = arith.constant 1 : index
    %1 = memref.load %arg1[%c1] : memref<4xf32, #tpu.memory_space<smem>>
    %c2 = arith.constant 2 : index
    %2 = memref.load %arg1[%c2] : memref<4xf32, #tpu.memory_space<smem>>
    %c3 = arith.constant 3 : index
    %3 = memref.load %arg1[%c3] : memref<4xf32, #tpu.memory_space<smem>>
    %c0_0 = arith.constant 0 : index
    %c0_1 = arith.constant 0 : index
    %4 = vector.load %arg2[%c0_0, %c0_1] : memref<3x512xf32, #tpu.memory_space<vmem>>, vector<1x512xf32>
    %5 = vector.broadcast %0 : f32 to vector<1x512xf32>
    %6 = arith.subf %4, %5 : vector<1x512xf32>
    %c1_2 = arith.constant 1 : index
    %c0_3 = arith.constant 0 : index
    %7 = vector.load %arg2[%c1_2, %c0_3] : memref<3x512xf32, #tpu.memory_space<vmem>>, vector<1x512xf32>
    %8 = vector.broadcast %1 : f32 to vector<1x512xf32>
    %9 = arith.subf %7, %8 : vector<1x512xf32>
    %c2_4 = arith.constant 2 : index
    %c0_5 = arith.constant 0 : index
    %10 = vector.load %arg2[%c2_4, %c0_5] : memref<3x512xf32, #tpu.memory_space<vmem>>, vector<1x512xf32>
    %11 = vector.broadcast %2 : f32 to vector<1x512xf32>
    %12 = arith.subf %10, %11 : vector<1x512xf32>
    %13 = arith.mulf %6, %6 : vector<1x512xf32>
    %14 = arith.mulf %9, %9 : vector<1x512xf32>
    %15 = arith.addf %13, %14 : vector<1x512xf32>
    %16 = arith.mulf %12, %12 : vector<1x512xf32>
    %17 = arith.addf %15, %16 : vector<1x512xf32>
    %18 = math.sqrt %17 : vector<1x512xf32>
    %19 = vector.broadcast %3 : f32 to vector<1x512xf32>
    %20 = arith.subf %18, %19 : vector<1x512xf32>
    %c0_6 = arith.constant 0 : index
    %c0_7 = arith.constant 0 : index
    %21 = vector.load %arg3[%c0_6, %c0_7] : memref<1x512xf32, #tpu.memory_space<vmem>>, vector<1x512xf32>
    tpu.vector_store %arg3[%c0_6, %c0_7], %20 {strides = array<i32>} : memref<1x512xf32, #tpu.memory_space<vmem>>, vector<1x512xf32>,
    return
  }
  func.func @transform_0(%arg0: i32) -> i32 {
    %c0_i32 = arith.constant 0 : i32
    %c0_i32_0 = arith.constant 0 : i32
    return %c0_i32 : i32
  }
  func.func @transform_1(%arg0: i32) -> (i32, i32) {
    %c0_i32 = arith.constant 0 : i32
    %c0_i32_0 = arith.constant 0 : i32
    return %c0_i32, %arg0 : i32, i32
  }
  func.func @transform_2(%arg0: i32) -> (i32, i32) {
    %c0_i32 = arith.constant 0 : i32
    %c0_i32_0 = arith.constant 0 : i32
    return %c0_i32, %arg0 : i32, i32
  }
}

</mosaic_0001>

<llo_original>
// kernel: tpu_custom_call.1
$region0: #{tpu_custom_call.1}
  #allocation0 [shape = 'u32[]', space=smem, size = 0x4, offset = 0x4, fixed_abs, tag = 'smem constant byte address 0x4 - core index']
  #allocation1 [shape = 'u32[144,128]{1,0:T(1,128)}', space=vmem, size = 0x12000, scoped, tag = 'internal scratch']
  %s0 = inlined_call_operand.hbm [shape: f32[4], index: 0, kind: input, shape index: {}]
  %s1 = inlined_call_operand.hbm [shape: f32[3,512], index: 1, kind: input, shape index: {}]
  %s2 = inlined_call_operand.hbm [shape: f32[1,512], index: 2, kind: output, shape index: {}]
  %s3 = sld [smem:[#allocation0]]
  $region26: #{tpu_custom_call.1} parent=0
    _
  %s5 = ssub.s32 1, %s3
  %s6 = scalar_select 0, %s5, %s3
  $region1: #{tpu_custom_call.1} parent=0
    #allocation2 [shape = 'u8[512]{0}', space=smem, size = 0x200, scoped, tag = 'input window, operand 0, single buffered']
    #allocation3 [shape = 's32[1]{0}', space=sflag, size = 0x4, scoped, tag = 'scoped memory for tpu_custom_call.1']
    #allocation4 [shape = 's32[1]{0}', space=sflag, size = 0x4, scoped, tag = 'scoped memory for tpu_custom_call.1']
    #allocation5 [shape = 's32[1]{0}', space=sflag, size = 0x4, scoped, tag = 'scoped memory for tpu_custom_call.1']
    #allocation6 [shape = 'u8[8192]{0}', space=vmem, size = 0x2000, scoped, tag = 'input window, operand 1, single buffered']
    #allocation7 [shape = 'u8[2048]{0}', space=vmem, size = 0x800, scoped, tag = 'output window, operand 0, single buffered']
    %7 = vsyncpa [#allocation5], 0
    %8 = vsyncpa [#allocation3], 0
    %9 = vsyncpa [#allocation4], 0
    // Predicated region
    $region2: #{tpu_custom_call.1} parent=1 // pred_check
      _
    $region3: #{tpu_custom_call.1} parent=1 // pred_check_branch
      %11 = sbr.rel (0) target = $region5
    $region4: #{tpu_custom_call.1} parent=1 // pred_region
      %s13 = ssub.s32 16, 16
      %14 = vsyncadd [#allocation5], %s13
      %17 = dma.hbm_to_smem %s0, 16, [#allocation2], [#allocation5]
    $region5: #{tpu_custom_call.1} parent=1 // pred_fallthru
      _
    // Predicated region
    $region6: #{tpu_custom_call.1} parent=1 // pred_check
      _
    $region7: #{tpu_custom_call.1} parent=1 // pred_check_branch
      %19 = sbr.rel (0) target = $region9
    $region8: #{tpu_custom_call.1} parent=1 // pred_region
      %s21 = ssub.s32 256, 256
      %22 = vsyncadd [#allocation3], %s21
      %s24 = sshll.u32 [#allocation6], 4
      %s25 = int_to_ptr.vmem [resolvable:$true] %s24
      %27 = dma.hbm_to_vmem [thread:$0]  %s1, 256, %s25, [#allocation3]
    $region9: #{tpu_custom_call.1} parent=1 // pred_fallthru
      _
    // Predicated region
    $region10: #{tpu_custom_call.1} parent=1 // pred_check
      _
    $region11: #{tpu_custom_call.1} parent=1 // pred_check_branch
      %29 = sbr.rel (0) target = $region13
    $region12: #{tpu_custom_call.1} parent=1 // pred_region
      %30 = dma.done [#allocation5], 16
    $region13: #{tpu_custom_call.1} parent=1 // pred_fallthru
      _
    // Predicated region
    $region14: #{tpu_custom_call.1} parent=1 // pred_check
      _
    $region15: #{tpu_custom_call.1} parent=1 // pred_check_branch
      %32 = sbr.rel (0) target = $region17
    $region16: #{tpu_custom_call.1} parent=1 // pred_region
      %33 = dma.done [#allocation3], 256
    $region17: #{tpu_custom_call.1} parent=1 // pred_fallthru
      _
    %34 = sfence
    %s35 = sld [smem:[#allocation2]]
    %s36 = sld [smem:[#allocation2 + $0x1]]
    %s37 = sld [smem:[#allocation2 + $0x2]]
    %s38 = sld [smem:[#allocation2 + $0x3]]
    %v39 = vld [vmem:[#allocation6] ss:$4 sm:$0xf]
    %v40 = vstv %s35
    %v41 = vsub.f32 %v39, %v40
    %s42 = scalar_lea.vmem [#allocation6], 1
    %v43 = vld [vmem:[%s42] ss:$4 sm:$0xf]
    %v44 = vstv %s36
    %v45 = vsub.f32 %v43, %v44
    %s46 = scalar_lea.vmem [#allocation6], 2
    %v47 = vld [vmem:[%s46] ss:$4 sm:$0xf]
    %v48 = vstv %s37
    %v49 = vsub.f32 %v47, %v48
    %v50 = vmul.f32 %v41, %v41
    %v51 = vmul.f32 %v45, %v45
    %v52 = vadd.f32 %v50, %v51
    %v53 = vmul.f32 %v49, %v49
    %v54 = vadd.f32 %v52, %v53
    %v55 = vrsqrt.pop %v54
    %v56 = vmul.f32 %v54, %v55
    %vm57 = vcmp.eq.f32.partialorder %v54, inf
    %v58 = vsel %vm57, %v54, %v56
    %vm59 = vcmp.eq.f32.partialorder %v54, 0.0
    %v60 = vand.u32 %v54, 2147483648
    %v61 = vsel %vm59, %v60, %v58
    %v62 = vstv %s38
    %v63 = vsub.f32 %v61, %v62
    %v64 = vlaneseq
    %vm65 = vcmp.ge.s32.totalorder %v64, 0
    %vm66 = vcmp.lt.s32.totalorder %v64, 512
    %vm67 = vmand %vm65, %vm66
    %68 = vst.msk [vmem:[#allocation7] sm:$0xf] %vm67, %v63
    // Predicated region
    $region18: #{tpu_custom_call.1} parent=1 // pred_check
      _
    $region19: #{tpu_custom_call.1} parent=1 // pred_check_branch
      %70 = sbr.rel (0) target = $region21
    $region20: #{tpu_custom_call.1} parent=1 // pred_region
      %s72 = ssub.s32 64, 64
      %73 = vsyncadd [#allocation4], %s72
      %s75 = sshll.u32 [#allocation7], 4
      %s76 = int_to_ptr.vmem [resolvable:$true] %s75
      %78 = dma.vmem_to_hbm [thread:$0]  %s76, 64, %s2, [#allocation4]
    $region21: #{tpu_custom_call.1} parent=1 // pred_fallthru
      _
    // Predicated region
    $region22: #{tpu_custom_call.1} parent=1 // pred_check
      _
    $region23: #{tpu_custom_call.1} parent=1 // pred_check_branch
      %80 = sbr.rel (0) target = $region25
    $region24: #{tpu_custom_call.1} parent=1 // pred_region
      %81 = dma.done [#allocation4], 64
    $region25: #{tpu_custom_call.1} parent=1 // pred_fallthru
      _
    %82 = vsyncpa [#allocation3], 1
    %83 = vsyncpa [#allocation4], 1
    %84 = vsyncpa [#allocation5], 1

</llo_original>
